<compile_context>
chip_gen: v7x
topology: tpu7x:2x2x1
jax: 0.10.0
libtpu: 0.0.40
codegen_flags: <defaults>
</compile_context>

<pallas_src>
import math

import jax
import jax.numpy as jnp
from jax.experimental import pallas as pl
from jax.experimental.pallas import tpu as pltpu


def _choose_seq_tile(T: int) -> int:
    """MXU-friendly sequence tile: 256 (v6e/v7x native), else 128 (v5e native),
    else the whole sequence (block == full dim is always legal)."""
    for t in (256, 128):
        if T % t == 0:
            return t
    return T


def _choose_head_block(B: int, ch: int, tq: int, tk: int, itemsize: int,
                       budget_bytes: int = 4 * 1024 * 1024) -> int:
    """Pick how many heads to batch per grid step while keeping the per-step
    VMEM footprint small enough for all generations (v7x: 64 MiB phys)."""
    per_head = (
        2 * (ch * tq + 2 * ch * tk) * itemsize  # double-buffered q/k/v tiles
        + 2 * ch * tq * itemsize                # double-buffered output tile
        + ch * tq * 4 + 2 * tq * 4              # f32 accumulator + m/l scratch
        + 2 * tk * tq * 4                       # f32 logits / probs intermediates
    )
    g = int(max(1, min(B, budget_bytes // max(per_head, 1))))
    while B % g:                                # g must divide B
        g -= 1
    return g


def _make_flash_attn_kernel(scale2: float):
    def kernel(q_ref, k_ref, v_ref, o_ref, m_sc, l_sc, acc_sc):
        # q_ref: (G, C, tq), k_ref/v_ref: (G, C, tk)  -- input dtype, channel-major
        # o_ref: (G, C, tq)
        # m_sc/l_sc: (G, 1, tq) f32 ; acc_sc: (G, C, tq) f32
        ki = pl.program_id(2)

        @pl.when(ki == 0)
        def _init():
            m_sc[...] = jnp.full(m_sc.shape, -jnp.inf, dtype=jnp.float32)
            l_sc[...] = jnp.zeros(l_sc.shape, dtype=jnp.float32)
            acc_sc[...] = jnp.zeros(acc_sc.shape, dtype=jnp.float32)

        q = q_ref[...] * scale2      # fold scale*scale = 1/sqrt(C) into q only
        k = k_ref[...]
        v = v_ref[...]

        # Key-major logits: s[g, s, t] = sum_c k[g, c, s] * q[g, c, t]
        # (contract the C dim of both operands -> no transposes).
        s = jax.lax.dot_general(
            k, q, dimension_numbers=(((1,), (1,)), ((0,), (0,))),
            preferred_element_type=jnp.float32)              # (G, tk, tq) f32

        m_prev = m_sc[...]                                   # (G, 1, tq)
        m_cur = jnp.max(s, axis=1, keepdims=True)            # (G, 1, tq)
        m_new = jnp.maximum(m_prev, m_cur)
        alpha = jnp.exp(m_prev - m_new)                      # rescale old state
        p = jnp.exp(s - m_new)                               # (G, tk, tq), unnormalized

        l_sc[...] = alpha * l_sc[...] + jnp.sum(p, axis=1, keepdims=True)
        m_sc[...] = m_new

        # PV: acc[g,c,t] += sum_s v[g,c,s] * p[g,s,t].  Probabilities cast back
        # to the input dtype (matches the reference); accumulate in f32.
        pv = jax.lax.dot_general(
            v, p.astype(v.dtype),
            dimension_numbers=(((2,), (1,)), ((0,), (0,))),
            preferred_element_type=jnp.float32)              # (G, C, tq) f32
        acc_sc[...] = alpha * acc_sc[...] + pv

        @pl.when(ki == pl.num_programs(2) - 1)
        def _finalize():
            # Deferred softmax normalization on the (C, tq) output (C*T work)
            # instead of the (tk, tq) probabilities (T^2 work); approx
            # reciprocal runs on the otherwise-idle EUP.
            inv_l = pl.reciprocal(l_sc[...], approx=True)    # (G, 1, tq)
            o_ref[...] = (acc_sc[...] * inv_l).astype(o_ref.dtype)

    return kernel


def qkv_attention_legacy(qkv: jax.Array, n_heads: int, *,
                         q_tile: int | None = None,
                         kv_tile: int | None = None,
                         head_block: int | None = None) -> jax.Array:
    """qkv: [N, H*3*C, T] -> [N, H*C, T] (QKVAttentionLegacy.forward)."""
    bs, width, length = qkv.shape
    assert width % (3 * n_heads) == 0, (width, n_heads)
    ch = width // (3 * n_heads)
    B = bs * n_heads
    T = length

    tq = q_tile if q_tile is not None else _choose_seq_tile(T)
    tk = kv_tile if kv_tile is not None else _choose_seq_tile(T)
    assert T % tq == 0 and T % tk == 0, (T, tq, tk)

    G = head_block if head_block is not None else _choose_head_block(
        B, ch, tq, tk, jnp.dtype(qkv.dtype).itemsize)
    assert B % G == 0, (B, G)

    # (N, H*3*C, T) -> (B, 3, C, T): q/k/v become separately tiled planes, so
    # the BlockSpec split never slices inside a sublane tile.
    qkv_r = qkv.reshape(B, 3, ch, T)

    grid = (B // G, T // tq, T // tk)          # kv (reduction) axis last
    scale2 = 1.0 / math.sqrt(ch)               # (1/sqrt(sqrt(C)))**2

    # TODO(synk): if T < 128 in a real workload, pack heads/time wrapper-side so
    # the written last dim is lane-dense (>=128) to avoid masked partial stores.
    out = pl.pallas_call(
        _make_flash_attn_kernel(scale2),
        out_shape=jax.ShapeDtypeStruct((B, ch, T), qkv.dtype),
        grid_spec=pltpu.PrefetchScalarGridSpec(
            num_scalar_prefetch=0,
            grid=grid,
            in_specs=[
                pl.BlockSpec((G, None, ch, tq), lambda b, qi, ki: (b, 0, 0, qi)),  # q
                pl.BlockSpec((G, None, ch, tk), lambda b, qi, ki: (b, 1, 0, ki)),  # k
                pl.BlockSpec((G, None, ch, tk), lambda b, qi, ki: (b, 2, 0, ki)),  # v
            ],
            out_specs=pl.BlockSpec((G, ch, tq), lambda b, qi, ki: (b, 0, qi)),
            scratch_shapes=[
                pltpu.VMEM((G, 1, tq), jnp.float32),    # running max  m
                pltpu.VMEM((G, 1, tq), jnp.float32),    # running sum  l
                pltpu.VMEM((G, ch, tq), jnp.float32),   # f32 output accumulator
            ],
        ),
        compiler_params=pltpu.CompilerParams(
            dimension_semantics=("parallel", "parallel", "arbitrary"),
            vmem_limit_bytes=32 * 1024 * 1024,   # safe on v5e/v6e and v7x (64 MiB phys)
        ),
    )(qkv_r, qkv_r, qkv_r)      # same array 3x: BlockSpecs select q/k/v planes

    return out.reshape(bs, n_heads * ch, T)


def _reference(qkv: jax.Array, n_heads: int) -> jax.Array:
    bs, width, length = qkv.shape
    ch = width // (3 * n_heads)
    x = qkv.reshape(bs * n_heads, 3 * ch, length)
    q, k, v = x[:, :ch], x[:, ch:2 * ch], x[:, 2 * ch:]
    scale = 1.0 / math.sqrt(math.sqrt(ch))
    w = jnp.einsum('bct,bcs->bts', q * scale, k * scale)
    w = jax.nn.softmax(w.astype(jnp.float32), axis=-1).astype(w.dtype)
    a = jnp.einsum('bts,bcs->bct', w, v)
    return a.reshape(bs, -1, length)


if __name__ == "__main__":
    key = jax.random.PRNGKey(0)
    k1, k2 = jax.random.split(key)

    # Tolerance accounts for the approximate (EUP) reciprocal and for possible
    # MXU pass-count differences vs XLA's einsum; real bugs give errors >~ 0.1.
    TOL = 1e-2

    # Test 1: tiny shapes — single kv step, all 4 heads batched per grid step.
    n_heads, N, C, T = 2, 2, 8, 16
    qkv1 = jax.random.normal(k1, (N, n_heads * 3 * C, T), dtype=jnp.float32)
    out1 = jax.block_until_ready(qkv_attention_legacy(qkv1, n_heads))
    ref1 = _reference(qkv1, n_heads)
    assert out1.shape == (N, n_heads * C, T), out1.shape
    err1 = float(jnp.max(jnp.abs(out1 - ref1)))
    assert err1 < TOL, err1

    # Test 2: exercises the tiled online-softmax path (2 q-tiles x 2 kv-tiles).
    n_heads2, N2, C2, T2 = 2, 1, 16, 256
    qkv2 = jax.random.normal(k2, (N2, n_heads2 * 3 * C2, T2), dtype=jnp.float32)
    out2 = jax.block_until_ready(
        qkv_attention_legacy(qkv2, n_heads2, q_tile=128, kv_tile=128, head_block=1))
    ref2 = _reference(qkv2, n_heads2)
    assert out2.shape == (N2, n_heads2 * C2, T2), out2.shape
    err2 = float(jnp.max(jnp.abs(out2 - ref2)))
    assert err2 < TOL, err2

    print("KERNEL_OK")
</pallas_src>

<mosaic_0001>
module attributes {stable_mosaic.version = 11 : i64} {
  func.func @kernel(%arg0: i32, %arg1: i32, %arg2: i32, %arg3: memref<4x1x8x16xf32, #tpu.memory_space<vmem>>, %arg4: memref<4x1x8x16xf32, #tpu.memory_space<vmem>>, %arg5: memref<4x1x8x16xf32, #tpu.memory_space<vmem>>, %arg6: memref<4x8x16xf32, #tpu.memory_space<vmem>>, %arg7: memref<4x1x16xf32, #tpu.memory_space<vmem>>, %arg8: memref<4x1x16xf32, #tpu.memory_space<vmem>>, %arg9: memref<4x8x16xf32, #tpu.memory_space<vmem>>) attributes {dimension_semantics = [#tpu.dimension_semantics<parallel>, #tpu.dimension_semantics<parallel>, #tpu.dimension_semantics<arbitrary>], iteration_bounds = array<i64: 1, 1, 1>, scalar_prefetch = 0 : i64, scratch_operands = 3 : i64, tpu.core_type = #tpu.core_type<tc>, window_params = [{transform_indices = @transform_0, window_bounds = array<i64: 4, 1, 8, 16>}, {transform_indices = @transform_1, window_bounds = array<i64: 4, 1, 8, 16>}, {transform_indices = @transform_2, window_bounds = array<i64: 4, 1, 8, 16>}, {transform_indices = @transform_3, window_bounds = array<i64: 4, 8, 16>}]} {
    %c0_i32 = arith.constant 0 : i32
    %0 = arith.cmpi eq, %arg2, %c0_i32 : i32
    %1 = arith.extui %0 : i1 to i32
    %c0_i32_0 = arith.constant 0 : i32
    %2 = arith.cmpi ne, %1, %c0_i32_0 : i32
    scf.if %2 {
      %cst_36 = arith.constant 0xFF800000 : f32
      %37 = vector.broadcast %cst_36 : f32 to vector<4x1x16xf32>
      %c0_37 = arith.constant 0 : index
      %c0_38 = arith.constant 0 : index
      %c0_39 = arith.constant 0 : index
      %38 = vector.load %arg7[%c0_37, %c0_38, %c0_39] : memref<4x1x16xf32, #tpu.memory_space<vmem>>, vector<4x1x16xf32>
      tpu.vector_store %arg7[%c0_37, %c0_38, %c0_39], %37 {strides = array<i32>} : memref<4x1x16xf32, #tpu.memory_space<vmem>>, vector<4x1x16xf32>,
      %cst_40 = arith.constant 0.000000e+00 : f32
      %39 = vector.broadcast %cst_40 : f32 to vector<4x1x16xf32>
      %c0_41 = arith.constant 0 : index
      %c0_42 = arith.constant 0 : index
      %c0_43 = arith.constant 0 : index
      %40 = vector.load %arg8[%c0_41, %c0_42, %c0_43] : memref<4x1x16xf32, #tpu.memory_space<vmem>>, vector<4x1x16xf32>
      tpu.vector_store %arg8[%c0_41, %c0_42, %c0_43], %39 {strides = array<i32>} : memref<4x1x16xf32, #tpu.memory_space<vmem>>, vector<4x1x16xf32>,
      %cst_44 = arith.constant 0.000000e+00 : f32
      %41 = vector.broadcast %cst_44 : f32 to vector<4x8x16xf32>
      %c0_45 = arith.constant 0 : index
      %c0_46 = arith.constant 0 : index
      %c0_47 = arith.constant 0 : index
      %42 = vector.load %arg9[%c0_45, %c0_46, %c0_47] : memref<4x8x16xf32, #tpu.memory_space<vmem>>, vector<4x8x16xf32>
      tpu.vector_store %arg9[%c0_45, %c0_46, %c0_47], %41 {strides = array<i32>} : memref<4x8x16xf32, #tpu.memory_space<vmem>>, vector<4x8x16xf32>,
    } else {
    }
    %c0 = arith.constant 0 : index
    %c0_1 = arith.constant 0 : index
    %c0_2 = arith.constant 0 : index
    %c0_3 = arith.constant 0 : index
    %3 = vector.load %arg3[%c0, %c0_1, %c0_2, %c0_3] : memref<4x1x8x16xf32, #tpu.memory_space<vmem>>, vector<4x1x8x16xf32>
    %4 = vector.shape_cast %3 : vector<4x1x8x16xf32> to vector<4x8x16xf32>
    %cst = arith.constant 0.353553385 : f32
    %5 = vector.broadcast %cst : f32 to vector<4x8x16xf32>
    %6 = arith.mulf %4, %5 : vector<4x8x16xf32>
    %c0_4 = arith.constant 0 : index
    %c0_5 = arith.constant 0 : index
    %c0_6 = arith.constant 0 : index
    %c0_7 = arith.constant 0 : index
    %7 = vector.load %arg4[%c0_4, %c0_5, %c0_6, %c0_7] : memref<4x1x8x16xf32, #tpu.memory_space<vmem>>, vector<4x1x8x16xf32>
    %8 = vector.shape_cast %7 : vector<4x1x8x16xf32> to vector<4x8x16xf32>
    %c0_8 = arith.constant 0 : index
    %c0_9 = arith.constant 0 : index
    %c0_10 = arith.constant 0 : index
    %c0_11 = arith.constant 0 : index
    %9 = vector.load %arg5[%c0_8, %c0_9, %c0_10, %c0_11] : memref<4x1x8x16xf32, #tpu.memory_space<vmem>>, vector<4x1x8x16xf32>
    %10 = vector.shape_cast %9 : vector<4x1x8x16xf32> to vector<4x8x16xf32>
    %cst_12 = arith.constant dense<0.000000e+00> : vector<4x16x16xf32>
    %11 = tpu.matmul %8, %6, %cst_12 {dimension_numbers = #tpu.dot_dimension_numbers<[1], [1], [2], [2], [0, 0, 0, 2, 1, 2], [0], [0]>} : vector<4x8x16xf32>, vector<4x8x16xf32>, vector<4x16x16xf32> -> vector<4x16x16xf32>
    %c0_13 = arith.constant 0 : index
    %c0_14 = arith.constant 0 : index
    %c0_15 = arith.constant 0 : index
    %12 = vector.load %arg7[%c0_13, %c0_14, %c0_15] : memref<4x1x16xf32, #tpu.memory_space<vmem>>, vector<4x1x16xf32>
    %cst_16 = arith.constant dense<0xFF800000> : vector<4x16xf32>
    %13 = vector.multi_reduction <maximumf>, %11, %cst_16 [1] : vector<4x16x16xf32> to vector<4x16xf32>
    %14 = vector.shape_cast %13 : vector<4x16xf32> to vector<4x1x16xf32>
    %15 = arith.maximumf %12, %14 : vector<4x1x16xf32>
    %16 = arith.subf %12, %15 : vector<4x1x16xf32>
    %17 = math.exp %16 : vector<4x1x16xf32>
    %18 = vector.broadcast %15 : vector<4x1x16xf32> to vector<4x16x16xf32>
    %19 = arith.subf %11, %18 : vector<4x16x16xf32>
    %20 = math.exp %19 : vector<4x16x16xf32>
    %c0_17 = arith.constant 0 : index
    %c0_18 = arith.constant 0 : index
    %c0_19 = arith.constant 0 : index
    %21 = vector.load %arg8[%c0_17, %c0_18, %c0_19] : memref<4x1x16xf32, #tpu.memory_space<vmem>>, vector<4x1x16xf32>
    %22 = arith.mulf %17, %21 : vector<4x1x16xf32>
    %cst_20 = arith.constant dense<0.000000e+00> : vector<4x16xf32>
    %23 = vector.multi_reduction <add>, %20, %cst_20 [1] : vector<4x16x16xf32> to vector<4x16xf32>
    %24 = vector.shape_cast %23 : vector<4x16xf32> to vector<4x1x16xf32>
    %25 = arith.addf %22, %24 : vector<4x1x16xf32>
    %c0_21 = arith.constant 0 : index
    %c0_22 = arith.constant 0 : index
    %c0_23 = arith.constant 0 : index
    %26 = vector.load %arg8[%c0_21, %c0_22, %c0_23] : memref<4x1x16xf32, #tpu.memory_space<vmem>>, vector<4x1x16xf32>
    tpu.vector_store %arg8[%c0_21, %c0_22, %c0_23], %25 {strides = array<i32>} : memref<4x1x16xf32, #tpu.memory_space<vmem>>, vector<4x1x16xf32>,
    %c0_24 = arith.constant 0 : index
    %c0_25 = arith.constant 0 : index
    %c0_26 = arith.constant 0 : index
    %27 = vector.load %arg7[%c0_24, %c0_25, %c0_26] : memref<4x1x16xf32, #tpu.memory_space<vmem>>, vector<4x1x16xf32>
    tpu.vector_store %arg7[%c0_24, %c0_25, %c0_26], %15 {strides = array<i32>} : memref<4x1x16xf32, #tpu.memory_space<vmem>>, vector<4x1x16xf32>,
    %cst_27 = arith.constant dense<0.000000e+00> : vector<4x8x16xf32>
    %28 = tpu.matmul %10, %20, %cst_27 {dimension_numbers = #tpu.dot_dimension_numbers<[2], [1], [1], [2], [0, 0, 0, 1, 1, 2], [0], [0]>} : vector<4x8x16xf32>, vector<4x16x16xf32>, vector<4x8x16xf32> -> vector<4x8x16xf32>
    %c0_28 = arith.constant 0 : index
    %c0_29 = arith.constant 0 : index
    %c0_30 = arith.constant 0 : index
    %29 = vector.load %arg9[%c0_28, %c0_29, %c0_30] : memref<4x8x16xf32, #tpu.memory_space<vmem>>, vector<4x8x16xf32>
    %30 = vector.broadcast %17 : vector<4x1x16xf32> to vector<4x8x16xf32>
    %31 = arith.mulf %30, %29 : vector<4x8x16xf32>
    %32 = arith.addf %31, %28 : vector<4x8x16xf32>
    %c0_31 = arith.constant 0 : index
    %c0_32 = arith.constant 0 : index
    %c0_33 = arith.constant 0 : index
    %33 = vector.load %arg9[%c0_31, %c0_32, %c0_33] : memref<4x8x16xf32, #tpu.memory_space<vmem>>, vector<4x8x16xf32>
    tpu.vector_store %arg9[%c0_31, %c0_32, %c0_33], %32 {strides = array<i32>} : memref<4x8x16xf32, #tpu.memory_space<vmem>>, vector<4x8x16xf32>,
    %c0_i32_34 = arith.constant 0 : i32
    %34 = arith.cmpi eq, %arg2, %c0_i32_34 : i32
    %35 = arith.extui %34 : i1 to i32
    %c0_i32_35 = arith.constant 0 : i32
    %36 = arith.cmpi ne, %35, %c0_i32_35 : i32
    scf.if %36 {
      %c0_36 = arith.constant 0 : index
      %c0_37 = arith.constant 0 : index
      %c0_38 = arith.constant 0 : index
      %37 = vector.load %arg8[%c0_36, %c0_37, %c0_38] : memref<4x1x16xf32, #tpu.memory_space<vmem>>, vector<4x1x16xf32>
      %38 = tpu.reciprocal %37 {approx = true} : vector<4x1x16xf32> -> vector<4x1x16xf32>
      %c0_39 = arith.constant 0 : index
      %c0_40 = arith.constant 0 : index
      %c0_41 = arith.constant 0 : index
      %39 = vector.load %arg9[%c0_39, %c0_40, %c0_41] : memref<4x8x16xf32, #tpu.memory_space<vmem>>, vector<4x8x16xf32>
      %40 = vector.broadcast %38 : vector<4x1x16xf32> to vector<4x8x16xf32>
      %41 = arith.mulf %39, %40 : vector<4x8x16xf32>
      %c0_42 = arith.constant 0 : index
      %c0_43 = arith.constant 0 : index
      %c0_44 = arith.constant 0 : index
      %42 = vector.load %arg6[%c0_42, %c0_43, %c0_44] : memref<4x8x16xf32, #tpu.memory_space<vmem>>, vector<4x8x16xf32>
      tpu.vector_store %arg6[%c0_42, %c0_43, %c0_44], %41 {strides = array<i32>} : memref<4x8x16xf32, #tpu.memory_space<vmem>>, vector<4x8x16xf32>,
    } else {
    }
    return
  }
  func.func @transform_0(%arg0: i32, %arg1: i32, %arg2: i32) -> (i32, i32, i32, i32) {
    %c0_i32 = arith.constant 0 : i32
    %c0_i32_0 = arith.constant 0 : i32
    %c0_i32_1 = arith.constant 0 : i32
    return %arg0, %c0_i32, %c0_i32_0, %arg1 : i32, i32, i32, i32
  }
  func.func @transform_1(%arg0: i32, %arg1: i32, %arg2: i32) -> (i32, i32, i32, i32) {
    %c1_i32 = arith.constant 1 : i32
    %c0_i32 = arith.constant 0 : i32
    %c0_i32_0 = arith.constant 0 : i32
    return %arg0, %c1_i32, %c0_i32, %arg2 : i32, i32, i32, i32
  }
  func.func @transform_2(%arg0: i32, %arg1: i32, %arg2: i32) -> (i32, i32, i32, i32) {
    %c2_i32 = arith.constant 2 : i32
    %c0_i32 = arith.constant 0 : i32
    %c0_i32_0 = arith.constant 0 : i32
    return %arg0, %c2_i32, %c0_i32, %arg2 : i32, i32, i32, i32
  }
  func.func @transform_3(%arg0: i32, %arg1: i32, %arg2: i32) -> (i32, i32, i32) {
    %c0_i32 = arith.constant 0 : i32
    %c0_i32_0 = arith.constant 0 : i32
    return %arg0, %c0_i32, %arg1 : i32, i32, i32
  }
}

</mosaic_0001>

<llo_original>
// kernel: tpu_custom_call.1
$region0: #{tpu_custom_call.1}
  #allocation0 [shape = 'u32[]', space=smem, size = 0x4, offset = 0x4, fixed_abs, tag = 'smem constant byte address 0x4 - core index']
  #allocation1 [shape = 'u32[144,128]{1,0:T(1,128)}', space=vmem, size = 0x12000, scoped, tag = 'internal scratch']
  #allocation2 [shape = 'f32[4,1,16]{2,1,0:T(1,128)}', space=vmem, size = 0x800, scoped, tag = 'scratch operand']
  #allocation3 [shape = 'f32[4,1,16]{2,1,0:T(1,128)}', space=vmem, size = 0x800, scoped, tag = 'scratch operand']
  #allocation4 [shape = 'f32[4,8,16]{2,1,0:T(8,128)}', space=vmem, size = 0x4000, scoped, tag = 'scratch operand']
  %s0 = inlined_call_operand.hbm [shape: f32[4,3,8,16], index: 0, kind: input, shape index: {}]
  %s1 = inlined_call_operand.hbm [shape: f32[4,3,8,16], index: 1, kind: input, shape index: {}]
  %s2 = inlined_call_operand.hbm [shape: f32[4,3,8,16], index: 2, kind: input, shape index: {}]
  %s3 = inlined_call_operand.hbm [shape: f32[4,8,16], index: 3, kind: output, shape index: {}]
  %s4 = sld [smem:[#allocation0]]
  $region42: #{tpu_custom_call.1} parent=0
    _
  %s6 = ssub.s32 1, %s4
  %s7 = scalar_select 0, %s6, %s4
  $region1: #{tpu_custom_call.1} parent=0
    #allocation5 [shape = 'u8[16384]{0}', space=vmem, size = 0x4000, scoped, tag = 'input window, operand 0, single buffered']
    #allocation6 [shape = 's32[1]{0}', space=sflag, size = 0x4, scoped, tag = 'scoped memory for tpu_custom_call.1']
    #allocation7 [shape = 's32[1]{0}', space=sflag, size = 0x4, scoped, tag = 'scoped memory for tpu_custom_call.1']
    #allocation8 [shape = 'u8[16384]{0}', space=vmem, size = 0x4000, scoped, tag = 'input window, operand 1, single buffered']
    #allocation9 [shape = 's32[1]{0}', space=sflag, size = 0x4, scoped, tag = 'scoped memory for tpu_custom_call.1']
    #allocation10 [shape = 'u8[16384]{0}', space=vmem, size = 0x4000, scoped, tag = 'input window, operand 2, single buffered']
    #allocation11 [shape = 'u8[16384]{0}', space=vmem, size = 0x4000, scoped, tag = 'output window, operand 0, single buffered']
    %8 = vsyncpa [#allocation6], 0
    %9 = vsyncpa [#allocation9], 0
    %10 = vsyncpa [#allocation7], 0
    // Predicated region
    $region2: #{tpu_custom_call.1} parent=1 // pred_check
      _
    $region3: #{tpu_custom_call.1} parent=1 // pred_check_branch
      %12 = sbr.rel (0) target = $region5
    $region4: #{tpu_custom_call.1} parent=1 // pred_region
      %s14 = ssub.s32 512, 512
      %15 = vsyncadd [#allocation6], %s14
      %s16 = sshll.u32 [#allocation5], 4
      %s17 = int_to_ptr.vmem [resolvable:$true] %s16
      %22 = dma.hbm_to_vmem [thread:$0]  %s0, 512, %s17, [#allocation6], 384, 128, 8
    $region5: #{tpu_custom_call.1} parent=1 // pred_fallthru
      _
    // Predicated region
    $region6: #{tpu_custom_call.1} parent=1 // pred_check
      _
    $region7: #{tpu_custom_call.1} parent=1 // pred_check_branch
      %24 = sbr.rel (0) target = $region9
    $region8: #{tpu_custom_call.1} parent=1 // pred_region
      %s26 = ssub.s32 512, 512
      %27 = vsyncadd [#allocation9], %s26
      %s28 = scalar_lea.hbm %s1, 128
      %s29 = sshll.u32 [#allocation8], 4
      %s30 = int_to_ptr.vmem [resolvable:$true] %s29
      %35 = dma.hbm_to_vmem [thread:$0]  %s28, 512, %s30, [#allocation9], 384, 128, 8
    $region9: #{tpu_custom_call.1} parent=1 // pred_fallthru
      _
    // Predicated region
    $region10: #{tpu_custom_call.1} parent=1 // pred_check
      _
    $region11: #{tpu_custom_call.1} parent=1 // pred_check_branch
      %37 = sbr.rel (0) target = $region13
    $region12: #{tpu_custom_call.1} parent=1 // pred_region
      %s39 = ssub.s32 512, 512
      %40 = vsyncadd [#allocation9], %s39
      %s41 = scalar_lea.hbm %s2, 256
      %s42 = sshll.u32 [#allocation10], 4
      %s43 = int_to_ptr.vmem [resolvable:$true] %s42
      %48 = dma.hbm_to_vmem [thread:$0]  %s41, 512, %s43, [#allocation9], 384, 128, 8
    $region13: #{tpu_custom_call.1} parent=1 // pred_fallthru
      _
    // Predicated region
    $region14: #{tpu_custom_call.1} parent=1 // pred_check
      _
    $region15: #{tpu_custom_call.1} parent=1 // pred_check_branch
      %50 = sbr.rel (0) target = $region17
    $region16: #{tpu_custom_call.1} parent=1 // pred_region
      %51 = dma.done [#allocation6], 512
    $region17: #{tpu_custom_call.1} parent=1 // pred_fallthru
      _
    // Predicated region
    $region18: #{tpu_custom_call.1} parent=1 // pred_check
      _
    $region19: #{tpu_custom_call.1} parent=1 // pred_check_branch
      %53 = sbr.rel (0) target = $region21
    $region20: #{tpu_custom_call.1} parent=1 // pred_region
      %54 = dma.done [#allocation9], 512
    $region21: #{tpu_custom_call.1} parent=1 // pred_fallthru
      _
    // Predicated region
    $region22: #{tpu_custom_call.1} parent=1 // pred_check
      _
    $region23: #{tpu_custom_call.1} parent=1 // pred_check_branch
      %56 = sbr.rel (0) target = $region25
    $region24: #{tpu_custom_call.1} parent=1 // pred_region
      %57 = dma.done [#allocation9], 512
    $region25: #{tpu_custom_call.1} parent=1 // pred_fallthru
      _
    %p58 = scmp.eq.s32.totalorder 0, 0
    // Predicated region
    $region26: #{tpu_custom_call.1} parent=1 // pred_check
      %p59 = pneg %p58
    $region27: #{tpu_custom_call.1} parent=1 // pred_check_branch
      %61 = sbr.rel (%p59) target = $region29
    $region28: #{tpu_custom_call.1} parent=1 // pred_region
      %vm62 = vcmask 122880
      %63 = vst.msk [vmem:[#allocation2] sm:$0x1] %vm62, -inf
      %64 = vst.msk [vmem:[#allocation2 + $0x1] sm:$0x1] %vm62, -inf
      %65 = vst.msk [vmem:[#allocation2 + $0x2] sm:$0x1] %vm62, -inf
      %66 = vst.msk [vmem:[#allocation2 + $0x3] sm:$0x1] %vm62, -inf
      %67 = vst.msk [vmem:[#allocation3] sm:$0x1] %vm62, 0.0
      %68 = vst.msk [vmem:[#allocation3 + $0x1] sm:$0x1] %vm62, 0.0
      %69 = vst.msk [vmem:[#allocation3 + $0x2] sm:$0x1] %vm62, 0.0
      %70 = vst.msk [vmem:[#allocation3 + $0x3] sm:$0x1] %vm62, 0.0
      %vm71 = vcmask 130048
      %72 = vst.msk [vmem:[#allocation4] sm:$0xff] %vm71, 0.0
      %73 = vst.msk [vmem:[#allocation4 + $0x8] sm:$0xff] %vm71, 0.0
      %74 = vst.msk [vmem:[#allocation4 + $0x10] sm:$0xff] %vm71, 0.0
      %75 = vst.msk [vmem:[#allocation4 + $0x18] sm:$0xff] %vm71, 0.0
    $region29: #{tpu_custom_call.1} parent=1 // pred_fallthru
      _
    %v76 = vld [vmem:[#allocation5] sm:$0xff]
    %v77 = vld [vmem:[#allocation5 + $0x8] sm:$0xff]
    %v78 = vld [vmem:[#allocation5 + $0x10] sm:$0xff]
    %v79 = vld [vmem:[#allocation5 + $0x18] sm:$0xff]
    %v80 = vmul.f32 %v76, 0.35355338
    %v81 = vmul.f32 %v77, 0.35355338
    %v82 = vmul.f32 %v78, 0.35355338
    %v83 = vmul.f32 %v79, 0.35355338
    %v84 = vld [vmem:[#allocation8] sm:$0xff]
    %v85 = vld [vmem:[#allocation8 + $0x8] sm:$0xff]
    %v86 = vld [vmem:[#allocation8 + $0x10] sm:$0xff]
    %v87 = vld [vmem:[#allocation8 + $0x18] sm:$0xff]
    %v88 = vld [vmem:[#allocation10] sm:$0xff]
    %v89 = vld [vmem:[#allocation10 + $0x8] sm:$0xff]
    %v90 = vld [vmem:[#allocation10 + $0x10] sm:$0xff]
    %v91 = vld [vmem:[#allocation10 + $0x18] sm:$0xff]
    %92 = vxpose.xlu0.b32.start [1/16] %v84, 128
    %93 = vxpose.xlu0.b32.cont [2/16] 0.0, 128
    %94 = vxpose.xlu0.b32.cont [3/16] 0.0, 128
    %95 = vxpose.xlu0.b32.cont [4/16] 0.0, 128
    %96 = vxpose.xlu0.b32.cont [5/16] 0.0, 128
    %97 = vxpose.xlu0.b32.cont [6/16] 0.0, 128
    %98 = vxpose.xlu0.b32.cont [7/16] 0.0, 128
    %99 = vxpose.xlu0.b32.cont [8/16] 0.0, 128
    %100 = vxpose.xlu0.b32.cont [9/16] 0.0, 128
    %101 = vxpose.xlu0.b32.cont [10/16] 0.0, 128
    %102 = vxpose.xlu0.b32.cont [11/16] 0.0, 128
    %103 = vxpose.xlu0.b32.cont [12/16] 0.0, 128
    %104 = vxpose.xlu0.b32.cont [13/16] 0.0, 128
    %105 = vxpose.xlu0.b32.cont [14/16] 0.0, 128
    %106 = vxpose.xlu0.b32.cont [15/16] 0.0, 128
    %107 = vxpose.xlu0.b32.end [16/16] 0.0, 128
    %v108 = vpop.trf.xlu0
    %v109 = vpop.trf.xlu0
    %v110 = vpop.trf.xlu0
    %v111 = vpop.trf.xlu0
    %v112 = vpop.trf.xlu0
    %v113 = vpop.trf.xlu0
    %v114 = vpop.trf.xlu0
    %v115 = vpop.trf.xlu0
    %v116 = vpop.trf.xlu0
    %v117 = vpop.trf.xlu0
    %v118 = vpop.trf.xlu0
    %v119 = vpop.trf.xlu0
    %v120 = vpop.trf.xlu0
    %v121 = vpop.trf.xlu0
    %v122 = vpop.trf.xlu0
    %v123 = vpop.trf.xlu0
    %vm124 = vcmask 64512
    %v126 = vsel %vm124, %v108, 0
    %v129 = vsel %vm124, %v109, 0
    %131 = vmatprep.subr.mxu0 0.0
    %132 = vmatpush1.msra.mxu0 %v80
    %133 = vmatprep.subr.mxu0 0.0
    %134 = vmatpush1.msra.mxu0 0.0
    %135 = vmatprep.subr.mxu0 0.0
    %136 = vmatpush1.msra.mxu0 0.0
    %137 = vmatprep.subr.mxu0 0.0
    %138 = vmatpush1.msra.mxu0 0.0
    %139 = vmatprep.subr.mxu0 0.0
    %140 = vmatpush1.msra.mxu0 0.0
    %141 = vmatprep.subr.mxu0 0.0
    %142 = vmatpush1.msra.mxu0 0.0
    %143 = vmatprep.subr.mxu0 0.0
    %144 = vmatpush1.msra.mxu0 0.0
    %145 = vmatprep.subr.mxu0 0.0
    %146 = vmatpush1.msra.mxu0 0.0
    %147 = vmatprep.subr.mxu0 0.0
    %148 = vmatpush1.msra.mxu0 0.0
    %149 = vmatprep.subr.mxu0 0.0
    %150 = vmatpush1.msra.mxu0 0.0
    %151 = vmatprep.subr.mxu0 0.0
    %152 = vmatpush1.msra.mxu0 0.0
    %153 = vmatprep.subr.mxu0 0.0
    %154 = vmatpush1.msra.mxu0 0.0
    %155 = vmatprep.subr.mxu0 0.0
    %156 = vmatpush1.msra.mxu0 0.0
    %157 = vmatprep.subr.mxu0 0.0
    %158 = vmatpush1.msra.mxu0 0.0
    %159 = vmatprep.subr.mxu0 0.0
    %160 = vmatpush1.msra.mxu0 0.0
    %161 = vmatprep.subr.mxu0 0.0
    %162 = vmatpush1.msra.mxu0 0.0
    %163 = vmatprep.subr.mxu0 0.0
    %164 = vmatpush1.msra.mxu0 0.0
    %165 = vmatprep.subr.mxu0 0.0
    %166 = vmatpush1.msra.mxu0 0.0
    %167 = vmatprep.subr.mxu0 0.0
    %168 = vmatpush1.msra.mxu0 0.0
    %169 = vmatprep.subr.mxu0 0.0
    %170 = vmatpush1.msra.mxu0 0.0
    %171 = vmatprep.subr.mxu0 0.0
    %172 = vmatpush1.msra.mxu0 0.0
    %173 = vmatprep.subr.mxu0 0.0
    %174 = vmatpush1.msra.mxu0 0.0
    %175 = vmatprep.subr.mxu0 0.0
    %176 = vmatpush1.msra.mxu0 0.0
    %177 = vmatprep.subr.mxu0 0.0
    %178 = vmatpush1.msra.mxu0 0.0
    %179 = vmatprep.subr.mxu0 0.0
    %180 = vmatpush1.msra.mxu0 0.0
    %181 = vmatprep.subr.mxu0 0.0
    %182 = vmatpush1.msra.mxu0 0.0
    %183 = vmatprep.subr.mxu0 0.0
    %184 = vmatpush1.msra.mxu0 0.0
    %185 = vmatprep.subr.mxu0 0.0
    %186 = vmatpush1.msra.mxu0 0.0
    %187 = vmatprep.subr.mxu0 0.0
    %188 = vmatpush1.msra.mxu0 0.0
    %189 = vmatprep.subr.mxu0 0.0
    %190 = vmatpush1.msra.mxu0 0.0
    %191 = vmatprep.subr.mxu0 0.0
    %192 = vmatpush1.msra.mxu0 0.0
    %193 = vmatprep.subr.mxu0 0.0
    %194 = vmatpush1.msra.mxu0 0.0
    %195 = vmatprep.mubr.f32.mxu0 0.0
    %196 = vmatmul.mubr.f32.gmra.mrb[0].mxu0 %v126
    %v197 = vpop.f32.mrb[0].mxu0
    %v198 = vadd.f32 0.0, %v197
    %v199 = vpop.f32.mrb[0].mxu0
    %200 = vmatprep.mubr.f32.mxu0 0.0
    %201 = vmatmul.mubr.f32.gmra.mrb[0].mxu0 %v129
    %v202 = vpop.f32.mrb[0].mxu0
    %v203 = vadd.f32 0.0, %v202
    %v204 = vpop.f32.mrb[0].mxu0
    %205 = vdwg.mxu0
    %206 = vxpose.xlu0.b32.start [1/16] %v85, 128
    %207 = vxpose.xlu0.b32.cont [2/16] 0.0, 128
    %208 = vxpose.xlu0.b32.cont [3/16] 0.0, 128
    %209 = vxpose.xlu0.b32.cont [4/16] 0.0, 128
    %210 = vxpose.xlu0.b32.cont [5/16] 0.0, 128
    %211 = vxpose.xlu0.b32.cont [6/16] 0.0, 128
    %212 = vxpose.xlu0.b32.cont [7/16] 0.0, 128
    %213 = vxpose.xlu0.b32.cont [8/16] 0.0, 128
    %214 = vxpose.xlu0.b32.cont [9/16] 0.0, 128
    %215 = vxpose.xlu0.b32.cont [10/16] 0.0, 128
    %216 = vxpose.xlu0.b32.cont [11/16] 0.0, 128
    %217 = vxpose.xlu0.b32.cont [12/16] 0.0, 128
    %218 = vxpose.xlu0.b32.cont [13/16] 0.0, 128
    %219 = vxpose.xlu0.b32.cont [14/16] 0.0, 128
    %220 = vxpose.xlu0.b32.cont [15/16] 0.0, 128
    %221 = vxpose.xlu0.b32.end [16/16] 0.0, 128
    %v222 = vpop.trf.xlu0
    %v223 = vpop.trf.xlu0
    %v224 = vpop.trf.xlu0
    %v225 = vpop.trf.xlu0
    %v226 = vpop.trf.xlu0
    %v227 = vpop.trf.xlu0
    %v228 = vpop.trf.xlu0
    %v229 = vpop.trf.xlu0
    %v230 = vpop.trf.xlu0
    %v231 = vpop.trf.xlu0
    %v232 = vpop.trf.xlu0
    %v233 = vpop.trf.xlu0
    %v234 = vpop.trf.xlu0
    %v235 = vpop.trf.xlu0
    %v236 = vpop.trf.xlu0
    %v237 = vpop.trf.xlu0
    %v239 = vsel %vm124, %v222, 0
    %v242 = vsel %vm124, %v223, 0
    %244 = vmatprep.subr.mxu0 0.0
    %245 = vmatpush1.msra.mxu0 %v81
    %246 = vmatprep.subr.mxu0 0.0
    %247 = vmatpush1.msra.mxu0 0.0
    %248 = vmatprep.subr.mxu0 0.0
    %249 = vmatpush1.msra.mxu0 0.0
    %250 = vmatprep.subr.mxu0 0.0
    %251 = vmatpush1.msra.mxu0 0.0
    %252 = vmatprep.subr.mxu0 0.0
    %253 = vmatpush1.msra.mxu0 0.0
    %254 = vmatprep.subr.mxu0 0.0
    %255 = vmatpush1.msra.mxu0 0.0
    %256 = vmatprep.subr.mxu0 0.0
    %257 = vmatpush1.msra.mxu0 0.0
    %258 = vmatprep.subr.mxu0 0.0
    %259 = vmatpush1.msra.mxu0 0.0
    %260 = vmatprep.subr.mxu0 0.0
    %261 = vmatpush1.msra.mxu0 0.0
    %262 = vmatprep.subr.mxu0 0.0
    %263 = vmatpush1.msra.mxu0 0.0
    %264 = vmatprep.subr.mxu0 0.0
    %265 = vmatpush1.msra.mxu0 0.0
    %266 = vmatprep.subr.mxu0 0.0
    %267 = vmatpush1.msra.mxu0 0.0
    %268 = vmatprep.subr.mxu0 0.0
    %269 = vmatpush1.msra.mxu0 0.0
    %270 = vmatprep.subr.mxu0 0.0
    %271 = vmatpush1.msra.mxu0 0.0
    %272 = vmatprep.subr.mxu0 0.0
    %273 = vmatpush1.msra.mxu0 0.0
    %274 = vmatprep.subr.mxu0 0.0
    %275 = vmatpush1.msra.mxu0 0.0
    %276 = vmatprep.subr.mxu0 0.0
    %277 = vmatpush1.msra.mxu0 0.0
    %278 = vmatprep.subr.mxu0 0.0
    %279 = vmatpush1.msra.mxu0 0.0
    %280 = vmatprep.subr.mxu0 0.0
    %281 = vmatpush1.msra.mxu0 0.0
    %282 = vmatprep.subr.mxu0 0.0
    %283 = vmatpush1.msra.mxu0 0.0
    %284 = vmatprep.subr.mxu0 0.0
    %285 = vmatpush1.msra.mxu0 0.0
    %286 = vmatprep.subr.mxu0 0.0
    %287 = vmatpush1.msra.mxu0 0.0
    %288 = vmatprep.subr.mxu0 0.0
    %289 = vmatpush1.msra.mxu0 0.0
    %290 = vmatprep.subr.mxu0 0.0
    %291 = vmatpush1.msra.mxu0 0.0
    %292 = vmatprep.subr.mxu0 0.0
    %293 = vmatpush1.msra.mxu0 0.0
    %294 = vmatprep.subr.mxu0 0.0
    %295 = vmatpush1.msra.mxu0 0.0
    %296 = vmatprep.subr.mxu0 0.0
    %297 = vmatpush1.msra.mxu0 0.0
    %298 = vmatprep.subr.mxu0 0.0
    %299 = vmatpush1.msra.mxu0 0.0
    %300 = vmatprep.subr.mxu0 0.0
    %301 = vmatpush1.msra.mxu0 0.0
    %302 = vmatprep.subr.mxu0 0.0
    %303 = vmatpush1.msra.mxu0 0.0
    %304 = vmatprep.subr.mxu0 0.0
    %305 = vmatpush1.msra.mxu0 0.0
    %306 = vmatprep.subr.mxu0 0.0
    %307 = vmatpush1.msra.mxu0 0.0
    %308 = vmatprep.mubr.f32.mxu0 0.0
    %309 = vmatmul.mubr.f32.gmra.mrb[0].mxu0 %v239
    %v310 = vpop.f32.mrb[0].mxu0
    %v311 = vadd.f32 0.0, %v310
    %v312 = vpop.f32.mrb[0].mxu0
    %313 = vmatprep.mubr.f32.mxu0 0.0
    %314 = vmatmul.mubr.f32.gmra.mrb[0].mxu0 %v242
    %v315 = vpop.f32.mrb[0].mxu0
    %v316 = vadd.f32 0.0, %v315
    %v317 = vpop.f32.mrb[0].mxu0
    %318 = vdwg.mxu0
    %319 = vxpose.xlu0.b32.start [1/16] %v86, 128
    %320 = vxpose.xlu0.b32.cont [2/16] 0.0, 128
    %321 = vxpose.xlu0.b32.cont [3/16] 0.0, 128
    %322 = vxpose.xlu0.b32.cont [4/16] 0.0, 128
    %323 = vxpose.xlu0.b32.cont [5/16] 0.0, 128
    %324 = vxpose.xlu0.b32.cont [6/16] 0.0, 128
    %325 = vxpose.xlu0.b32.cont [7/16] 0.0, 128
    %326 = vxpose.xlu0.b32.cont [8/16] 0.0, 128
    %327 = vxpose.xlu0.b32.cont [9/16] 0.0, 128
    %328 = vxpose.xlu0.b32.cont [10/16] 0.0, 128
    %329 = vxpose.xlu0.b32.cont [11/16] 0.0, 128
    %330 = vxpose.xlu0.b32.cont [12/16] 0.0, 128
    %331 = vxpose.xlu0.b32.cont [13/16] 0.0, 128
    %332 = vxpose.xlu0.b32.cont [14/16] 0.0, 128
    %333 = vxpose.xlu0.b32.cont [15/16] 0.0, 128
    %334 = vxpose.xlu0.b32.end [16/16] 0.0, 128
    %v335 = vpop.trf.xlu0
    %v336 = vpop.trf.xlu0
    %v337 = vpop.trf.xlu0
    %v338 = vpop.trf.xlu0
    %v339 = vpop.trf.xlu0
    %v340 = vpop.trf.xlu0
    %v341 = vpop.trf.xlu0
    %v342 = vpop.trf.xlu0
    %v343 = vpop.trf.xlu0
    %v344 = vpop.trf.xlu0
    %v345 = vpop.trf.xlu0
    %v346 = vpop.trf.xlu0
    %v347 = vpop.trf.xlu0
    %v348 = vpop.trf.xlu0
    %v349 = vpop.trf.xlu0
    %v350 = vpop.trf.xlu0
    %v352 = vsel %vm124, %v335, 0
    %v355 = vsel %vm124, %v336, 0
    %357 = vmatprep.subr.mxu0 0.0
    %358 = vmatpush1.msra.mxu0 %v82
    %359 = vmatprep.subr.mxu0 0.0
    %360 = vmatpush1.msra.mxu0 0.0
    %361 = vmatprep.subr.mxu0 0.0
    %362 = vmatpush1.msra.mxu0 0.0
    %363 = vmatprep.subr.mxu0 0.0
    %364 = vmatpush1.msra.mxu0 0.0
    %365 = vmatprep.subr.mxu0 0.0
    %366 = vmatpush1.msra.mxu0 0.0
    %367 = vmatprep.subr.mxu0 0.0
    %368 = vmatpush1.msra.mxu0 0.0
    %369 = vmatprep.subr.mxu0 0.0
    %370 = vmatpush1.msra.mxu0 0.0
    %371 = vmatprep.subr.mxu0 0.0
    %372 = vmatpush1.msra.mxu0 0.0
    %373 = vmatprep.subr.mxu0 0.0
    %374 = vmatpush1.msra.mxu0 0.0
    %375 = vmatprep.subr.mxu0 0.0
    %376 = vmatpush1.msra.mxu0 0.0
    %377 = vmatprep.subr.mxu0 0.0
    %378 = vmatpush1.msra.mxu0 0.0
    %379 = vmatprep.subr.mxu0 0.0
    %380 = vmatpush1.msra.mxu0 0.0
    %381 = vmatprep.subr.mxu0 0.0
    %382 = vmatpush1.msra.mxu0 0.0
    %383 = vmatprep.subr.mxu0 0.0
    %384 = vmatpush1.msra.mxu0 0.0
    %385 = vmatprep.subr.mxu0 0.0
    %386 = vmatpush1.msra.mxu0 0.0
    %387 = vmatprep.subr.mxu0 0.0
    %388 = vmatpush1.msra.mxu0 0.0
    %389 = vmatprep.subr.mxu0 0.0
    %390 = vmatpush1.msra.mxu0 0.0
    %391 = vmatprep.subr.mxu0 0.0
    %392 = vmatpush1.msra.mxu0 0.0
    %393 = vmatprep.subr.mxu0 0.0
    %394 = vmatpush1.msra.mxu0 0.0
    %395 = vmatprep.subr.mxu0 0.0
    %396 = vmatpush1.msra.mxu0 0.0
    %397 = vmatprep.subr.mxu0 0.0
    %398 = vmatpush1.msra.mxu0 0.0
    %399 = vmatprep.subr.mxu0 0.0
    %400 = vmatpush1.msra.mxu0 0.0
    %401 = vmatprep.subr.mxu0 0.0
    %402 = vmatpush1.msra.mxu0 0.0
    %403 = vmatprep.subr.mxu0 0.0
    %404 = vmatpush1.msra.mxu0 0.0
    %405 = vmatprep.subr.mxu0 0.0
    %406 = vmatpush1.msra.mxu0 0.0
    %407 = vmatprep.subr.mxu0 0.0
    %408 = vmatpush1.msra.mxu0 0.0
    %409 = vmatprep.subr.mxu0 0.0
    %410 = vmatpush1.msra.mxu0 0.0
    %411 = vmatprep.subr.mxu0 0.0
    %412 = vmatpush1.msra.mxu0 0.0
    %413 = vmatprep.subr.mxu0 0.0
    %414 = vmatpush1.msra.mxu0 0.0
    %415 = vmatprep.subr.mxu0 0.0
    %416 = vmatpush1.msra.mxu0 0.0
    %417 = vmatprep.subr.mxu0 0.0
    %418 = vmatpush1.msra.mxu0 0.0
    %419 = vmatprep.subr.mxu0 0.0
    %420 = vmatpush1.msra.mxu0 0.0
    %421 = vmatprep.mubr.f32.mxu0 0.0
    %422 = vmatmul.mubr.f32.gmra.mrb[0].mxu0 %v352
    %v423 = vpop.f32.mrb[0].mxu0
    %v424 = vadd.f32 0.0, %v423
    %v425 = vpop.f32.mrb[0].mxu0
    %426 = vmatprep.mubr.f32.mxu0 0.0
    %427 = vmatmul.mubr.f32.gmra.mrb[0].mxu0 %v355
    %v428 = vpop.f32.mrb[0].mxu0
    %v429 = vadd.f32 0.0, %v428
    %v430 = vpop.f32.mrb[0].mxu0
    %431 = vdwg.mxu0
    %432 = vxpose.xlu0.b32.start [1/16] %v87, 128
    %433 = vxpose.xlu0.b32.cont [2/16] 0.0, 128
    %434 = vxpose.xlu0.b32.cont [3/16] 0.0, 128
    %435 = vxpose.xlu0.b32.cont [4/16] 0.0, 128
    %436 = vxpose.xlu0.b32.cont [5/16] 0.0, 128
    %437 = vxpose.xlu0.b32.cont [6/16] 0.0, 128
    %438 = vxpose.xlu0.b32.cont [7/16] 0.0, 128
    %439 = vxpose.xlu0.b32.cont [8/16] 0.0, 128
    %440 = vxpose.xlu0.b32.cont [9/16] 0.0, 128
    %441 = vxpose.xlu0.b32.cont [10/16] 0.0, 128
    %442 = vxpose.xlu0.b32.cont [11/16] 0.0, 128
    %443 = vxpose.xlu0.b32.cont [12/16] 0.0, 128
    %444 = vxpose.xlu0.b32.cont [13/16] 0.0, 128
    %445 = vxpose.xlu0.b32.cont [14/16] 0.0, 128
    %446 = vxpose.xlu0.b32.cont [15/16] 0.0, 128
    %447 = vxpose.xlu0.b32.end [16/16] 0.0, 128
    %v448 = vpop.trf.xlu0
    %v449 = vpop.trf.xlu0
    %v450 = vpop.trf.xlu0
    %v451 = vpop.trf.xlu0
    %v452 = vpop.trf.xlu0
    %v453 = vpop.trf.xlu0
    %v454 = vpop.trf.xlu0
    %v455 = vpop.trf.xlu0
    %v456 = vpop.trf.xlu0
    %v457 = vpop.trf.xlu0
    %v458 = vpop.trf.xlu0
    %v459 = vpop.trf.xlu0
    %v460 = vpop.trf.xlu0
    %v461 = vpop.trf.xlu0
    %v462 = vpop.trf.xlu0
    %v463 = vpop.trf.xlu0
    %v465 = vsel %vm124, %v448, 0
    %v468 = vsel %vm124, %v449, 0
    %470 = vmatprep.subr.mxu0 0.0
    %471 = vmatpush1.msra.mxu0 %v83
    %472 = vmatprep.subr.mxu0 0.0
    %473 = vmatpush1.msra.mxu0 0.0
    %474 = vmatprep.subr.mxu0 0.0
    %475 = vmatpush1.msra.mxu0 0.0
    %476 = vmatprep.subr.mxu0 0.0
    %477 = vmatpush1.msra.mxu0 0.0
    %478 = vmatprep.subr.mxu0 0.0
    %479 = vmatpush1.msra.mxu0 0.0
    %480 = vmatprep.subr.mxu0 0.0
    %481 = vmatpush1.msra.mxu0 0.0
    %482 = vmatprep.subr.mxu0 0.0
    %483 = vmatpush1.msra.mxu0 0.0
    %484 = vmatprep.subr.mxu0 0.0
    %485 = vmatpush1.msra.mxu0 0.0
    %486 = vmatprep.subr.mxu0 0.0
    %487 = vmatpush1.msra.mxu0 0.0
    %488 = vmatprep.subr.mxu0 0.0
    %489 = vmatpush1.msra.mxu0 0.0
    %490 = vmatprep.subr.mxu0 0.0
    %491 = vmatpush1.msra.mxu0 0.0
    %492 = vmatprep.subr.mxu0 0.0
    %493 = vmatpush1.msra.mxu0 0.0
    %494 = vmatprep.subr.mxu0 0.0
    %495 = vmatpush1.msra.mxu0 0.0
    %496 = vmatprep.subr.mxu0 0.0
    %497 = vmatpush1.msra.mxu0 0.0
    %498 = vmatprep.subr.mxu0 0.0
    %499 = vmatpush1.msra.mxu0 0.0
    %500 = vmatprep.subr.mxu0 0.0
    %501 = vmatpush1.msra.mxu0 0.0
    %502 = vmatprep.subr.mxu0 0.0
    %503 = vmatpush1.msra.mxu0 0.0
    %504 = vmatprep.subr.mxu0 0.0
    %505 = vmatpush1.msra.mxu0 0.0
    %506 = vmatprep.subr.mxu0 0.0
    %507 = vmatpush1.msra.mxu0 0.0
    %508 = vmatprep.subr.mxu0 0.0
    %509 = vmatpush1.msra.mxu0 0.0
    %510 = vmatprep.subr.mxu0 0.0
    %511 = vmatpush1.msra.mxu0 0.0
    %512 = vmatprep.subr.mxu0 0.0
    %513 = vmatpush1.msra.mxu0 0.0
    %514 = vmatprep.subr.mxu0 0.0
    %515 = vmatpush1.msra.mxu0 0.0
    %516 = vmatprep.subr.mxu0 0.0
    %517 = vmatpush1.msra.mxu0 0.0
    %518 = vmatprep.subr.mxu0 0.0
    %519 = vmatpush1.msra.mxu0 0.0
    %520 = vmatprep.subr.mxu0 0.0
    %521 = vmatpush1.msra.mxu0 0.0
    %522 = vmatprep.subr.mxu0 0.0
    %523 = vmatpush1.msra.mxu0 0.0
    %524 = vmatprep.subr.mxu0 0.0
    %525 = vmatpush1.msra.mxu0 0.0
    %526 = vmatprep.subr.mxu0 0.0
    %527 = vmatpush1.msra.mxu0 0.0
    %528 = vmatprep.subr.mxu0 0.0
    %529 = vmatpush1.msra.mxu0 0.0
    %530 = vmatprep.subr.mxu0 0.0
    %531 = vmatpush1.msra.mxu0 0.0
    %532 = vmatprep.subr.mxu0 0.0
    %533 = vmatpush1.msra.mxu0 0.0
    %534 = vmatprep.mubr.f32.mxu0 0.0
    %535 = vmatmul.mubr.f32.gmra.mrb[0].mxu0 %v465
    %v536 = vpop.f32.mrb[0].mxu0
    %v537 = vadd.f32 0.0, %v536
    %v538 = vpop.f32.mrb[0].mxu0
    %539 = vmatprep.mubr.f32.mxu0 0.0
    %540 = vmatmul.mubr.f32.gmra.mrb[0].mxu0 %v468
    %v541 = vpop.f32.mrb[0].mxu0
    %v542 = vadd.f32 0.0, %v541
    %v543 = vpop.f32.mrb[0].mxu0
    %544 = vdwg.mxu0
    %v545 = vld [vmem:[#allocation2] sm:$0x1]
    %v546 = vld [vmem:[#allocation2 + $0x1] sm:$0x1]
    %v547 = vld [vmem:[#allocation2 + $0x2] sm:$0x1]
    %v548 = vld [vmem:[#allocation2 + $0x3] sm:$0x1]
    %vm549 = vcmask 130048
    %v550 = vsel %vm549, %v198, -inf
    %v551 = vsel %vm549, %v203, -inf
    %v552 = vmax.f32 %v550, %v551
    %v553 = vrot.slane %v552, 4
    %v554 = vmax.f32 %v552, %v553
    %v555 = vrot.slane %v554, 2
    %v556 = vmax.f32 %v554, %v555
    %v557 = vrot.slane %v556, 1
    %v558 = vmax.f32 %v556, %v557
    %v559 = vsel %vm549, %v311, -inf
    %v560 = vsel %vm549, %v316, -inf
    %v561 = vmax.f32 %v559, %v560
    %v562 = vrot.slane %v561, 4
    %v563 = vmax.f32 %v561, %v562
    %v564 = vrot.slane %v563, 2
    %v565 = vmax.f32 %v563, %v564
    %v566 = vrot.slane %v565, 1
    %v567 = vmax.f32 %v565, %v566
    %v568 = vsel %vm549, %v424, -inf
    %v569 = vsel %vm549, %v429, -inf
    %v570 = vmax.f32 %v568, %v569
    %v571 = vrot.slane %v570, 4
    %v572 = vmax.f32 %v570, %v571
    %v573 = vrot.slane %v572, 2
    %v574 = vmax.f32 %v572, %v573
    %v575 = vrot.slane %v574, 1
    %v576 = vmax.f32 %v574, %v575
    %v577 = vsel %vm549, %v537, -inf
    %v578 = vsel %vm549, %v542, -inf
    %v579 = vmax.f32 %v577, %v578
    %v580 = vrot.slane %v579, 4
    %v581 = vmax.f32 %v579, %v580
    %v582 = vrot.slane %v581, 2
    %v583 = vmax.f32 %v581, %v582
    %v584 = vrot.slane %v583, 1
    %v585 = vmax.f32 %v583, %v584
    %v586 = vmax.f32 %v545, %v558
    %v587 = vmax.f32 %v546, %v567
    %v588 = vmax.f32 %v547, %v576
    %v589 = vmax.f32 %v548, %v585
    %v590 = vsub.f32 %v545, %v586
    %v591 = vsub.f32 %v546, %v587
    %v592 = vsub.f32 %v547, %v588
    %v593 = vsub.f32 %v548, %v589
    %v594 = vmul.f32 %v590, 1.442695
    %v595 = vpow.pop %v594
    %v596 = vmul.f32 %v591, 1.442695
    %v597 = vpow.pop %v596
    %v598 = vmul.f32 %v592, 1.442695
    %v599 = vpow.pop %v598
    %v600 = vmul.f32 %v593, 1.442695
    %v601 = vpow.pop %v600
    %v606 = vlaneseq
    %v607 = vshrl.u32 %v606, 7
    %v608 = vsub.s32 0, %v607
    %v609 = vrot.slane %v586, %v608
    %v610 = vlaneseq
    %v611 = vshrl.u32 %v610, 7
    %v612 = vsub.s32 0, %v611
    %v613 = vrot.slane %v587, %v612
    %v614 = vlaneseq
    %v615 = vshrl.u32 %v614, 7
    %v616 = vsub.s32 0, %v615
    %v617 = vrot.slane %v588, %v616
    %v618 = vlaneseq
    %v619 = vshrl.u32 %v618, 7
    %v620 = vsub.s32 0, %v619
    %v621 = vrot.slane %v589, %v620
    %v626 = vsub.f32 %v198, %v609
    %v627 = vsub.f32 %v203, %v609
    %v628 = vsub.f32 %v311, %v613
    %v629 = vsub.f32 %v316, %v613
    %v630 = vsub.f32 %v424, %v617
    %v631 = vsub.f32 %v429, %v617
    %v632 = vsub.f32 %v537, %v621
    %v633 = vsub.f32 %v542, %v621
    %v634 = vmul.f32 %v626, 1.442695
    %v635 = vpow.pop %v634
    %v636 = vmul.f32 %v627, 1.442695
    %v637 = vpow.pop %v636
    %v638 = vmul.f32 %v628, 1.442695
    %v639 = vpow.pop %v638
    %v640 = vmul.f32 %v629, 1.442695
    %v641 = vpow.pop %v640
    %v642 = vmul.f32 %v630, 1.442695
    %v643 = vpow.pop %v642
    %v644 = vmul.f32 %v631, 1.442695
    %v645 = vpow.pop %v644
    %v646 = vmul.f32 %v632, 1.442695
    %v647 = vpow.pop %v646
    %v648 = vmul.f32 %v633, 1.442695
    %v649 = vpow.pop %v648
    %v650 = vld [vmem:[#allocation3] sm:$0x1]
    %v651 = vld [vmem:[#allocation3 + $0x1] sm:$0x1]
    %v652 = vld [vmem:[#allocation3 + $0x2] sm:$0x1]
    %v653 = vld [vmem:[#allocation3 + $0x3] sm:$0x1]
    %v654 = vmul.f32 %v595, %v650
    %v655 = vmul.f32 %v597, %v651
    %v656 = vmul.f32 %v599, %v652
    %v657 = vmul.f32 %v601, %v653
    %v658 = vsel %vm549, %v635, 0.0
    %v659 = vsel %vm549, %v637, 0.0
    %v660 = vadd.f32 %v658, %v659
    %v661 = vrot.slane %v660, 4
    %v662 = vadd.f32 %v660, %v661
    %v663 = vrot.slane %v662, 2
    %v664 = vadd.f32 %v662, %v663
    %v665 = vrot.slane %v664, 1
    %v666 = vadd.f32 %v664, %v665
    %v667 = vsel %vm549, %v639, 0.0
    %v668 = vsel %vm549, %v641, 0.0
    %v669 = vadd.f32 %v667, %v668
    %v670 = vrot.slane %v669, 4
    %v671 = vadd.f32 %v669, %v670
    %v672 = vrot.slane %v671, 2
    %v673 = vadd.f32 %v671, %v672
    %v674 = vrot.slane %v673, 1
    %v675 = vadd.f32 %v673, %v674
    %v676 = vsel %vm549, %v643, 0.0
    %v677 = vsel %vm549, %v645, 0.0
    %v678 = vadd.f32 %v676, %v677
    %v679 = vrot.slane %v678, 4
    %v680 = vadd.f32 %v678, %v679
    %v681 = vrot.slane %v680, 2
    %v682 = vadd.f32 %v680, %v681
    %v683 = vrot.slane %v682, 1
    %v684 = vadd.f32 %v682, %v683
    %v685 = vsel %vm549, %v647, 0.0
    %v686 = vsel %vm549, %v649, 0.0
    %v687 = vadd.f32 %v685, %v686
    %v688 = vrot.slane %v687, 4
    %v689 = vadd.f32 %v687, %v688
    %v690 = vrot.slane %v689, 2
    %v691 = vadd.f32 %v689, %v690
    %v692 = vrot.slane %v691, 1
    %v693 = vadd.f32 %v691, %v692
    %v694 = vadd.f32 %v654, %v666
    %v695 = vadd.f32 %v655, %v675
    %v696 = vadd.f32 %v656, %v684
    %v697 = vadd.f32 %v657, %v693
    %vm698 = vcmask 122880
    %699 = vst.msk [vmem:[#allocation3] sm:$0x1] %vm698, %v694
    %700 = vst.msk [vmem:[#allocation3 + $0x1] sm:$0x1] %vm698, %v695
    %701 = vst.msk [vmem:[#allocation3 + $0x2] sm:$0x1] %vm698, %v696
    %702 = vst.msk [vmem:[#allocation3 + $0x3] sm:$0x1] %vm698, %v697
    %703 = vst.msk [vmem:[#allocation2] sm:$0x1] %vm698, %v586
    %704 = vst.msk [vmem:[#allocation2 + $0x1] sm:$0x1] %vm698, %v587
    %705 = vst.msk [vmem:[#allocation2 + $0x2] sm:$0x1] %vm698, %v588
    %706 = vst.msk [vmem:[#allocation2 + $0x3] sm:$0x1] %vm698, %v589
    %v708 = vsel %vm549, %v88, 0
    %710 = vmatprep.subr.mxu0 0.0
    %711 = vmatpush1.msra.mxu0 %v635
    %712 = vmatprep.subr.mxu0 0.0
    %713 = vmatpush1.msra.mxu0 %v637
    %714 = vmatprep.subr.mxu0 0.0
    %715 = vmatpush1.msra.mxu0 0.0
    %716 = vmatprep.subr.mxu0 0.0
    %717 = vmatpush1.msra.mxu0 0.0
    %718 = vmatprep.subr.mxu0 0.0
    %719 = vmatpush1.msra.mxu0 0.0
    %720 = vmatprep.subr.mxu0 0.0
    %721 = vmatpush1.msra.mxu0 0.0
    %722 = vmatprep.subr.mxu0 0.0
    %723 = vmatpush1.msra.mxu0 0.0
    %724 = vmatprep.subr.mxu0 0.0
    %725 = vmatpush1.msra.mxu0 0.0
    %726 = vmatprep.subr.mxu0 0.0
    %727 = vmatpush1.msra.mxu0 0.0
    %728 = vmatprep.subr.mxu0 0.0
    %729 = vmatpush1.msra.mxu0 0.0
    %730 = vmatprep.subr.mxu0 0.0
    %731 = vmatpush1.msra.mxu0 0.0
    %732 = vmatprep.subr.mxu0 0.0
    %733 = vmatpush1.msra.mxu0 0.0
    %734 = vmatprep.subr.mxu0 0.0
    %735 = vmatpush1.msra.mxu0 0.0
    %736 = vmatprep.subr.mxu0 0.0
    %737 = vmatpush1.msra.mxu0 0.0
    %738 = vmatprep.subr.mxu0 0.0
    %739 = vmatpush1.msra.mxu0 0.0
    %740 = vmatprep.subr.mxu0 0.0
    %741 = vmatpush1.msra.mxu0 0.0
    %742 = vmatprep.subr.mxu0 0.0
    %743 = vmatpush1.msra.mxu0 0.0
    %744 = vmatprep.subr.mxu0 0.0
    %745 = vmatpush1.msra.mxu0 0.0
    %746 = vmatprep.subr.mxu0 0.0
    %747 = vmatpush1.msra.mxu0 0.0
    %748 = vmatprep.subr.mxu0 0.0
    %749 = vmatpush1.msra.mxu0 0.0
    %750 = vmatprep.subr.mxu0 0.0
    %751 = vmatpush1.msra.mxu0 0.0
    %752 = vmatprep.subr.mxu0 0.0
    %753 = vmatpush1.msra.mxu0 0.0
    %754 = vmatprep.subr.mxu0 0.0
    %755 = vmatpush1.msra.mxu0 0.0
    %756 = vmatprep.subr.mxu0 0.0
    %757 = vmatpush1.msra.mxu0 0.0
    %758 = vmatprep.subr.mxu0 0.0
    %759 = vmatpush1.msra.mxu0 0.0
    %760 = vmatprep.subr.mxu0 0.0
    %761 = vmatpush1.msra.mxu0 0.0
    %762 = vmatprep.subr.mxu0 0.0
    %763 = vmatpush1.msra.mxu0 0.0
    %764 = vmatprep.subr.mxu0 0.0
    %765 = vmatpush1.msra.mxu0 0.0
    %766 = vmatprep.subr.mxu0 0.0
    %767 = vmatpush1.msra.mxu0 0.0
    %768 = vmatprep.subr.mxu0 0.0
    %769 = vmatpush1.msra.mxu0 0.0
    %770 = vmatprep.subr.mxu0 0.0
    %771 = vmatpush1.msra.mxu0 0.0
    %772 = vmatprep.subr.mxu0 0.0
    %773 = vmatpush1.msra.mxu0 0.0
    %774 = vmatprep.mubr.f32.mxu0 0.0
    %775 = vmatmul.mubr.f32.gmra.mrb[0].mxu0 %v708
    %v776 = vpop.f32.mrb[0].mxu0
    %v777 = vadd.f32 0.0, %v776
    %v778 = vpop.f32.mrb[0].mxu0
    %779 = vdwg.mxu0
    %v781 = vsel %vm549, %v89, 0
    %783 = vmatprep.subr.mxu0 0.0
    %784 = vmatpush1.msra.mxu0 %v639
    %785 = vmatprep.subr.mxu0 0.0
    %786 = vmatpush1.msra.mxu0 %v641
    %787 = vmatprep.subr.mxu0 0.0
    %788 = vmatpush1.msra.mxu0 0.0
    %789 = vmatprep.subr.mxu0 0.0
    %790 = vmatpush1.msra.mxu0 0.0
    %791 = vmatprep.subr.mxu0 0.0
    %792 = vmatpush1.msra.mxu0 0.0
    %793 = vmatprep.subr.mxu0 0.0
    %794 = vmatpush1.msra.mxu0 0.0
    %795 = vmatprep.subr.mxu0 0.0
    %796 = vmatpush1.msra.mxu0 0.0
    %797 = vmatprep.subr.mxu0 0.0
    %798 = vmatpush1.msra.mxu0 0.0
    %799 = vmatprep.subr.mxu0 0.0
    %800 = vmatpush1.msra.mxu0 0.0
    %801 = vmatprep.subr.mxu0 0.0
    %802 = vmatpush1.msra.mxu0 0.0
    %803 = vmatprep.subr.mxu0 0.0
    %804 = vmatpush1.msra.mxu0 0.0
    %805 = vmatprep.subr.mxu0 0.0
    %806 = vmatpush1.msra.mxu0 0.0
    %807 = vmatprep.subr.mxu0 0.0
    %808 = vmatpush1.msra.mxu0 0.0
    %809 = vmatprep.subr.mxu0 0.0
    %810 = vmatpush1.msra.mxu0 0.0
    %811 = vmatprep.subr.mxu0 0.0
    %812 = vmatpush1.msra.mxu0 0.0
    %813 = vmatprep.subr.mxu0 0.0
    %814 = vmatpush1.msra.mxu0 0.0
    %815 = vmatprep.subr.mxu0 0.0
    %816 = vmatpush1.msra.mxu0 0.0
    %817 = vmatprep.subr.mxu0 0.0
    %818 = vmatpush1.msra.mxu0 0.0
    %819 = vmatprep.subr.mxu0 0.0
    %820 = vmatpush1.msra.mxu0 0.0
    %821 = vmatprep.subr.mxu0 0.0
    %822 = vmatpush1.msra.mxu0 0.0
    %823 = vmatprep.subr.mxu0 0.0
    %824 = vmatpush1.msra.mxu0 0.0
    %825 = vmatprep.subr.mxu0 0.0
    %826 = vmatpush1.msra.mxu0 0.0
    %827 = vmatprep.subr.mxu0 0.0
    %828 = vmatpush1.msra.mxu0 0.0
    %829 = vmatprep.subr.mxu0 0.0
    %830 = vmatpush1.msra.mxu0 0.0
    %831 = vmatprep.subr.mxu0 0.0
    %832 = vmatpush1.msra.mxu0 0.0
    %833 = vmatprep.subr.mxu0 0.0
    %834 = vmatpush1.msra.mxu0 0.0
    %835 = vmatprep.subr.mxu0 0.0
    %836 = vmatpush1.msra.mxu0 0.0
    %837 = vmatprep.subr.mxu0 0.0
    %838 = vmatpush1.msra.mxu0 0.0
    %839 = vmatprep.subr.mxu0 0.0
    %840 = vmatpush1.msra.mxu0 0.0
    %841 = vmatprep.subr.mxu0 0.0
    %842 = vmatpush1.msra.mxu0 0.0
    %843 = vmatprep.subr.mxu0 0.0
    %844 = vmatpush1.msra.mxu0 0.0
    %845 = vmatprep.subr.mxu0 0.0
    %846 = vmatpush1.msra.mxu0 0.0
    %847 = vmatprep.mubr.f32.mxu0 0.0
    %848 = vmatmul.mubr.f32.gmra.mrb[0].mxu0 %v781
    %v849 = vpop.f32.mrb[0].mxu0
    %v850 = vadd.f32 0.0, %v849
    %v851 = vpop.f32.mrb[0].mxu0
    %852 = vdwg.mxu0
    %v854 = vsel %vm549, %v90, 0
    %856 = vmatprep.subr.mxu0 0.0
    %857 = vmatpush1.msra.mxu0 %v643
    %858 = vmatprep.subr.mxu0 0.0
    %859 = vmatpush1.msra.mxu0 %v645
    %860 = vmatprep.subr.mxu0 0.0
    %861 = vmatpush1.msra.mxu0 0.0
    %862 = vmatprep.subr.mxu0 0.0
    %863 = vmatpush1.msra.mxu0 0.0
    %864 = vmatprep.subr.mxu0 0.0
    %865 = vmatpush1.msra.mxu0 0.0
    %866 = vmatprep.subr.mxu0 0.0
    %867 = vmatpush1.msra.mxu0 0.0
    %868 = vmatprep.subr.mxu0 0.0
    %869 = vmatpush1.msra.mxu0 0.0
    %870 = vmatprep.subr.mxu0 0.0
    %871 = vmatpush1.msra.mxu0 0.0
    %872 = vmatprep.subr.mxu0 0.0
    %873 = vmatpush1.msra.mxu0 0.0
    %874 = vmatprep.subr.mxu0 0.0
    %875 = vmatpush1.msra.mxu0 0.0
    %876 = vmatprep.subr.mxu0 0.0
    %877 = vmatpush1.msra.mxu0 0.0
    %878 = vmatprep.subr.mxu0 0.0
    %879 = vmatpush1.msra.mxu0 0.0
    %880 = vmatprep.subr.mxu0 0.0
    %881 = vmatpush1.msra.mxu0 0.0
    %882 = vmatprep.subr.mxu0 0.0
    %883 = vmatpush1.msra.mxu0 0.0
    %884 = vmatprep.subr.mxu0 0.0
    %885 = vmatpush1.msra.mxu0 0.0
    %886 = vmatprep.subr.mxu0 0.0
    %887 = vmatpush1.msra.mxu0 0.0
    %888 = vmatprep.subr.mxu0 0.0
    %889 = vmatpush1.msra.mxu0 0.0
    %890 = vmatprep.subr.mxu0 0.0
    %891 = vmatpush1.msra.mxu0 0.0
    %892 = vmatprep.subr.mxu0 0.0
    %893 = vmatpush1.msra.mxu0 0.0
    %894 = vmatprep.subr.mxu0 0.0
    %895 = vmatpush1.msra.mxu0 0.0
    %896 = vmatprep.subr.mxu0 0.0
    %897 = vmatpush1.msra.mxu0 0.0
    %898 = vmatprep.subr.mxu0 0.0
    %899 = vmatpush1.msra.mxu0 0.0
    %900 = vmatprep.subr.mxu0 0.0
    %901 = vmatpush1.msra.mxu0 0.0
    %902 = vmatprep.subr.mxu0 0.0
    %903 = vmatpush1.msra.mxu0 0.0
    %904 = vmatprep.subr.mxu0 0.0
    %905 = vmatpush1.msra.mxu0 0.0
    %906 = vmatprep.subr.mxu0 0.0
    %907 = vmatpush1.msra.mxu0 0.0
    %908 = vmatprep.subr.mxu0 0.0
    %909 = vmatpush1.msra.mxu0 0.0
    %910 = vmatprep.subr.mxu0 0.0
    %911 = vmatpush1.msra.mxu0 0.0
    %912 = vmatprep.subr.mxu0 0.0
    %913 = vmatpush1.msra.mxu0 0.0
    %914 = vmatprep.subr.mxu0 0.0
    %915 = vmatpush1.msra.mxu0 0.0
    %916 = vmatprep.subr.mxu0 0.0
    %917 = vmatpush1.msra.mxu0 0.0
    %918 = vmatprep.subr.mxu0 0.0
    %919 = vmatpush1.msra.mxu0 0.0
    %920 = vmatprep.mubr.f32.mxu0 0.0
    %921 = vmatmul.mubr.f32.gmra.mrb[0].mxu0 %v854
    %v922 = vpop.f32.mrb[0].mxu0
    %v923 = vadd.f32 0.0, %v922
    %v924 = vpop.f32.mrb[0].mxu0
    %925 = vdwg.mxu0
    %v927 = vsel %vm549, %v91, 0
    %929 = vmatprep.subr.mxu0 0.0
    %930 = vmatpush1.msra.mxu0 %v647
    %931 = vmatprep.subr.mxu0 0.0
    %932 = vmatpush1.msra.mxu0 %v649
    %933 = vmatprep.subr.mxu0 0.0
    %934 = vmatpush1.msra.mxu0 0.0
    %935 = vmatprep.subr.mxu0 0.0
    %936 = vmatpush1.msra.mxu0 0.0
    %937 = vmatprep.subr.mxu0 0.0
    %938 = vmatpush1.msra.mxu0 0.0
    %939 = vmatprep.subr.mxu0 0.0
    %940 = vmatpush1.msra.mxu0 0.0
    %941 = vmatprep.subr.mxu0 0.0
    %942 = vmatpush1.msra.mxu0 0.0
    %943 = vmatprep.subr.mxu0 0.0
    %944 = vmatpush1.msra.mxu0 0.0
    %945 = vmatprep.subr.mxu0 0.0
    %946 = vmatpush1.msra.mxu0 0.0
    %947 = vmatprep.subr.mxu0 0.0
    %948 = vmatpush1.msra.mxu0 0.0
    %949 = vmatprep.subr.mxu0 0.0
    %950 = vmatpush1.msra.mxu0 0.0
    %951 = vmatprep.subr.mxu0 0.0
    %952 = vmatpush1.msra.mxu0 0.0
    %953 = vmatprep.subr.mxu0 0.0
    %954 = vmatpush1.msra.mxu0 0.0
    %955 = vmatprep.subr.mxu0 0.0
    %956 = vmatpush1.msra.mxu0 0.0
    %957 = vmatprep.subr.mxu0 0.0
    %958 = vmatpush1.msra.mxu0 0.0
    %959 = vmatprep.subr.mxu0 0.0
    %960 = vmatpush1.msra.mxu0 0.0
    %961 = vmatprep.subr.mxu0 0.0
    %962 = vmatpush1.msra.mxu0 0.0
    %963 = vmatprep.subr.mxu0 0.0
    %964 = vmatpush1.msra.mxu0 0.0
    %965 = vmatprep.subr.mxu0 0.0
    %966 = vmatpush1.msra.mxu0 0.0
    %967 = vmatprep.subr.mxu0 0.0
    %968 = vmatpush1.msra.mxu0 0.0
    %969 = vmatprep.subr.mxu0 0.0
    %970 = vmatpush1.msra.mxu0 0.0
    %971 = vmatprep.subr.mxu0 0.0
    %972 = vmatpush1.msra.mxu0 0.0
    %973 = vmatprep.subr.mxu0 0.0
    %974 = vmatpush1.msra.mxu0 0.0
    %975 = vmatprep.subr.mxu0 0.0
    %976 = vmatpush1.msra.mxu0 0.0
    %977 = vmatprep.subr.mxu0 0.0
    %978 = vmatpush1.msra.mxu0 0.0
    %979 = vmatprep.subr.mxu0 0.0
    %980 = vmatpush1.msra.mxu0 0.0
    %981 = vmatprep.subr.mxu0 0.0
    %982 = vmatpush1.msra.mxu0 0.0
    %983 = vmatprep.subr.mxu0 0.0
    %984 = vmatpush1.msra.mxu0 0.0
    %985 = vmatprep.subr.mxu0 0.0
    %986 = vmatpush1.msra.mxu0 0.0
    %987 = vmatprep.subr.mxu0 0.0
    %988 = vmatpush1.msra.mxu0 0.0
    %989 = vmatprep.subr.mxu0 0.0
    %990 = vmatpush1.msra.mxu0 0.0
    %991 = vmatprep.subr.mxu0 0.0
    %992 = vmatpush1.msra.mxu0 0.0
    %993 = vmatprep.mubr.f32.mxu0 0.0
    %994 = vmatmul.mubr.f32.gmra.mrb[0].mxu0 %v927
    %v995 = vpop.f32.mrb[0].mxu0
    %v996 = vadd.f32 0.0, %v995
    %v997 = vpop.f32.mrb[0].mxu0
    %998 = vdwg.mxu0
    %v999 = vld [vmem:[#allocation4] sm:$0xff]
    %v1000 = vld [vmem:[#allocation4 + $0x8] sm:$0xff]
    %v1001 = vld [vmem:[#allocation4 + $0x10] sm:$0xff]
    %v1002 = vld [vmem:[#allocation4 + $0x18] sm:$0xff]
    %v1007 = vlaneseq
    %v1008 = vshrl.u32 %v1007, 7
    %v1009 = vsub.s32 0, %v1008
    %v1010 = vrot.slane %v595, %v1009
    %v1011 = vlaneseq
    %v1012 = vshrl.u32 %v1011, 7
    %v1013 = vsub.s32 0, %v1012
    %v1014 = vrot.slane %v597, %v1013
    %v1015 = vlaneseq
    %v1016 = vshrl.u32 %v1015, 7
    %v1017 = vsub.s32 0, %v1016
    %v1018 = vrot.slane %v599, %v1017
    %v1019 = vlaneseq
    %v1020 = vshrl.u32 %v1019, 7
    %v1021 = vsub.s32 0, %v1020
    %v1022 = vrot.slane %v601, %v1021
    %v1027 = vmul.f32 %v1010, %v999
    %v1028 = vmul.f32 %v1014, %v1000
    %v1029 = vmul.f32 %v1018, %v1001
    %v1030 = vmul.f32 %v1022, %v1002
    %v1031 = vadd.f32 %v1027, %v777
    %v1032 = vadd.f32 %v1028, %v850
    %v1033 = vadd.f32 %v1029, %v923
    %v1034 = vadd.f32 %v1030, %v996
    %1035 = vst.msk [vmem:[#allocation4] sm:$0xff] %vm549, %v1031
    %1036 = vst.msk [vmem:[#allocation4 + $0x8] sm:$0xff] %vm549, %v1032
    %1037 = vst.msk [vmem:[#allocation4 + $0x10] sm:$0xff] %vm549, %v1033
    %1038 = vst.msk [vmem:[#allocation4 + $0x18] sm:$0xff] %vm549, %v1034
    // Predicated region
    $region30: #{tpu_custom_call.1} parent=1 // pred_check
      %p1039 = pneg %p58
    $region31: #{tpu_custom_call.1} parent=1 // pred_check_branch
      %1041 = sbr.rel (%p1039) target = $region33
    $region32: #{tpu_custom_call.1} parent=1 // pred_region
      %v1042 = vld [vmem:[#allocation3] sm:$0x1]
      %v1043 = vld [vmem:[#allocation3 + $0x1] sm:$0x1]
      %v1044 = vld [vmem:[#allocation3 + $0x2] sm:$0x1]
      %v1045 = vld [vmem:[#allocation3 + $0x3] sm:$0x1]
      %v1046 = vrcp.pop %v1042
      %v1047 = vrcp.pop %v1043
      %v1048 = vrcp.pop %v1044
      %v1049 = vrcp.pop %v1045
      %v1050 = vld [vmem:[#allocation4] sm:$0xff]
      %v1051 = vld [vmem:[#allocation4 + $0x8] sm:$0xff]
      %v1052 = vld [vmem:[#allocation4 + $0x10] sm:$0xff]
      %v1053 = vld [vmem:[#allocation4 + $0x18] sm:$0xff]
      %v1058 = vlaneseq
      %v1059 = vshrl.u32 %v1058, 7
      %v1060 = vsub.s32 0, %v1059
      %v1061 = vrot.slane %v1046, %v1060
      %v1062 = vlaneseq
      %v1063 = vshrl.u32 %v1062, 7
      %v1064 = vsub.s32 0, %v1063
      %v1065 = vrot.slane %v1047, %v1064
      %v1066 = vlaneseq
      %v1067 = vshrl.u32 %v1066, 7
      %v1068 = vsub.s32 0, %v1067
      %v1069 = vrot.slane %v1048, %v1068
      %v1070 = vlaneseq
      %v1071 = vshrl.u32 %v1070, 7
      %v1072 = vsub.s32 0, %v1071
      %v1073 = vrot.slane %v1049, %v1072
      %v1078 = vmul.f32 %v1050, %v1061
      %v1079 = vmul.f32 %v1051, %v1065
      %v1080 = vmul.f32 %v1052, %v1069
      %v1081 = vmul.f32 %v1053, %v1073
      %1082 = vst.msk [vmem:[#allocation11] sm:$0xff] %vm549, %v1078
      %1083 = vst.msk [vmem:[#allocation11 + $0x8] sm:$0xff] %vm549, %v1079
      %1084 = vst.msk [vmem:[#allocation11 + $0x10] sm:$0xff] %vm549, %v1080
      %1085 = vst.msk [vmem:[#allocation11 + $0x18] sm:$0xff] %vm549, %v1081
    $region33: #{tpu_custom_call.1} parent=1 // pred_fallthru
      _
    // Predicated region
    $region34: #{tpu_custom_call.1} parent=1 // pred_check
      _
    $region35: #{tpu_custom_call.1} parent=1 // pred_check_branch
      %1087 = sbr.rel (0) target = $region37
    $region36: #{tpu_custom_call.1} parent=1 // pred_region
      %s1089 = ssub.s32 512, 512
      %1090 = vsyncadd [#allocation7], %s1089
      %s1091 = sshll.u32 [#allocation11], 4
      %s1092 = int_to_ptr.vmem [resolvable:$true] %s1091
      %1097 = dma.vmem_to_hbm [thread:$0]  %s1092, 512, %s3, [#allocation7], 128, 128, 8
    $region37: #{tpu_custom_call.1} parent=1 // pred_fallthru
      _
    // Predicated region
    $region38: #{tpu_custom_call.1} parent=1 // pred_check
      _
    $region39: #{tpu_custom_call.1} parent=1 // pred_check_branch
      %1099 = sbr.rel (0) target = $region41
    $region40: #{tpu_custom_call.1} parent=1 // pred_region
      %1100 = dma.done [#allocation7], 512
    $region41: #{tpu_custom_call.1} parent=1 // pred_fallthru
      _
    %1101 = vsyncpa [#allocation6], 1
    %1102 = vsyncpa [#allocation9], 1
    %1103 = vsyncpa [#allocation7], 1

</llo_original>
